<compile_context>
chip_gen: v7x
topology: tpu7x:2x2x1
jax: 0.10.0
libtpu: 0.0.40
codegen_flags: <defaults>
</compile_context>

<pallas_src>
import jax
import jax.numpy as jnp
import numpy as np
from jax.experimental import pallas as pl
from jax.experimental.pallas import tpu as pltpu

LANE = 128
SUBLANE = 8


def _round_up(x, m):
    return ((x + m - 1) // m) * m


# ---------------------------------------------------------------------------
# Kernel: the whole eval-mode MLPUnet is one affine map  out = x @ W + b.
# ---------------------------------------------------------------------------
def mlpunet_kernel(x_ref, w_ref, b_ref, o_ref):
    # Cast activations to the weight dtype (f32 by default, bf16 if packed so),
    # accumulate in f32 on the MXU, do the bias add in f32 on the VPU.
    x = x_ref[...].astype(w_ref.dtype)
    acc = jnp.dot(x, w_ref[...], preferred_element_type=jnp.float32)
    o_ref[...] = (acc + b_ref[...]).astype(o_ref.dtype)


# ---------------------------------------------------------------------------
# Parameters (deterministic init matching the PyTorch module's shapes; weights
# are kept in PyTorch (out_features, in_features) layout until pack_params).
# ---------------------------------------------------------------------------
def init_params(key, n_points, depth):
    def linear_params(key, in_f, out_f):
        kw, kb = jax.random.split(key)
        bound = 1.0 / jnp.sqrt(jnp.float32(in_f))
        w = jax.random.uniform(kw, (out_f, in_f), jnp.float32, -bound, bound)
        b = jax.random.uniform(kb, (out_f,), jnp.float32, -bound, bound)
        return w, b

    keys = jax.random.split(key, 2 + 3 * depth)
    k = iter(keys)

    params = {"input": linear_params(next(k), n_points, n_points)}

    params["layers"] = []
    for i in range(depth):
        f = n_points // (2 ** i)
        params["layers"].append(linear_params(next(k), f, f))

    params["downsample"] = []
    for i in range(depth):
        params["downsample"].append(
            linear_params(next(k), n_points // (2 ** i), n_points // (2 ** (i + 1))))

    # upsample is appended for i = depth-1 .. 0, so upsample[j] is the Linear of
    # width n_points // 2**(depth-1-j) — applied in that order in forward().
    params["upsample"] = []
    for i in range(depth - 1, -1, -1):
        f = n_points // (2 ** i)
        params["upsample"].append(linear_params(next(k), f, f))

    params["output"] = linear_params(next(k), n_points, n_points)
    return params


# ---------------------------------------------------------------------------
# One-time host-side (outside jit) collapse of the whole eval-mode network.
# ---------------------------------------------------------------------------
def pack_params(params, depth, n_points, *, lane=LANE, weight_dtype=jnp.float32):
    """Collapse the all-affine network into a single (W_total, b_total).

    Tracks (M, c) such that the current activation equals  input @ M + c.
    A Linear layer (PyTorch layout W:(out,in), b:(out,)) composes as
        M <- M @ W.T,   c <- c @ W.T + b,
    and cat([x, skip], dim=1) concatenates the column blocks of (M, c).
    Accumulated in float64 so the only rounding difference vs. the
    layer-by-layer reference is the single final f32 matmul.
    Result is zero-padded to lane-dense (multiple of 128) feature width."""
    n = n_points
    f64 = lambda a: np.asarray(a, np.float64)

    def apply_linear(M, c, wb):
        w, b = wb
        wt = f64(w).T                      # (in, out)
        return M @ wt, c @ wt + f64(b)

    M = np.eye(n, dtype=np.float64)
    c = np.zeros((n,), dtype=np.float64)

    M, c = apply_linear(M, c, params["input"])

    skips = []
    for i in range(depth):
        M, c = apply_linear(M, c, params["layers"][i])       # identity activation
        M, c = apply_linear(M, c, params["downsample"][i])   # dropout = identity (eval)
        skips.append((M, c))

    for j in range(depth):
        Ms, cs = skips.pop(-1)                               # j=0: skip == x -> cat([x, x])
        M = np.concatenate([M, Ms], axis=1)
        c = np.concatenate([c, cs], axis=0)
        M, c = apply_linear(M, c, params["upsample"][j])

    M, c = apply_linear(M, c, params["output"])

    pn = _round_up(n, lane)
    w_p = np.zeros((pn, pn), np.float32)
    w_p[:n, :n] = M.astype(np.float32)
    b_p = np.zeros((1, pn), np.float32)
    b_p[0, :n] = c.astype(np.float32)
    # Weight dtype knob: bf16 on v6e/v7x roughly doubles MXU throughput and
    # halves weight traffic (will not meet the tight f32 tolerance below).
    return jnp.asarray(w_p).astype(weight_dtype), jnp.asarray(b_p)


# ---------------------------------------------------------------------------
# Forward wrapper.
# ---------------------------------------------------------------------------
def mlpunet_forward(x, packed, *, batch_tile=None, lane=LANE):
    """Whole MLPUnet forward in one Pallas call.

    batch_tile=None  -> single grid step (best on single-TC v5e/v6e).
    batch_tile=B//2  -> 2 batch tiles on the "parallel" axis so both v7x
                        TensorCores get work.
    """
    w, b = packed
    pn = w.shape[1]
    B, n = x.shape
    assert n <= pn, (n, pn)

    if batch_tile is None:
        bt = _round_up(B, SUBLANE)
    else:
        bt = _round_up(min(batch_tile, B), SUBLANE)
    b_pad = _round_up(B, bt)

    needs_pad = (b_pad != B) or (pn != n)
    if needs_pad:
        # Only for ragged / non-lane-dense shapes; at the default shapes the
        # input goes to the kernel untouched (no extra HBM round trip).
        x_in = jnp.zeros((b_pad, pn), x.dtype).at[:B, :n].set(x)
    else:
        x_in = x

    out = pl.pallas_call(
        mlpunet_kernel,
        out_shape=jax.ShapeDtypeStruct((b_pad, pn), x.dtype),
        grid_spec=pltpu.PrefetchScalarGridSpec(
            num_scalar_prefetch=0,
            grid=(b_pad // bt,),
            in_specs=[
                pl.BlockSpec((bt, pn), lambda i: (i, 0)),   # activations, tiled over batch
                pl.BlockSpec((pn, pn), lambda i: (0, 0)),   # collapsed weight, resident in VMEM
                pl.BlockSpec((1, pn), lambda i: (0, 0)),    # collapsed bias,  resident in VMEM
            ],
            out_specs=pl.BlockSpec((bt, pn), lambda i: (i, 0)),
        ),
        compiler_params=pltpu.CompilerParams(
            # Batch axis is embarrassingly parallel; with >=2 tiles this lets the
            # two v7x TensorCores split the work, harmless on single-TC chips.
            dimension_semantics=("parallel",),
        ),
    )(x_in, w, b)

    if needs_pad:
        out = out[:B, :n]
    return out


# ---------------------------------------------------------------------------
# Pure-JAX reference of the original layer-by-layer forward (with concatenate).
# ---------------------------------------------------------------------------
def mlpunet_reference(x, params, depth):
    def lin(x, wb):
        w, b = wb
        return x @ w.T + b

    x = lin(x, params["input"])
    skips = []
    for i in range(depth):
        x = lin(x, params["layers"][i])
        x = lin(x, params["downsample"][i])
        skips.append(x)
    for i in range(depth):
        x = jnp.concatenate([x, skips.pop(-1)], axis=1)
        x = lin(x, params["upsample"][i])
    return lin(x, params["output"])


if __name__ == "__main__":
    # Small shapes consistent with the module: n_points is the feature width,
    # input is (batch, n_points).  n_points=128 is lane-dense and batch=256 is a
    # multiple of 8, so no wrapper padding and a single grid step.
    N_POINTS = 128
    DEPTH = 3
    BATCH = 256

    key = jax.random.PRNGKey(0)
    kx, kp = jax.random.split(key)
    x = jax.random.normal(kx, (BATCH, N_POINTS), dtype=jnp.float32)
    params = init_params(kp, N_POINTS, DEPTH)

    # One-time host-side collapse / padding of all parameters (outside jit).
    packed = pack_params(params, DEPTH, N_POINTS)

    fwd = jax.jit(mlpunet_forward)
    out = jax.block_until_ready(fwd(x, packed))

    ref = mlpunet_reference(x, params, DEPTH)
    assert out.shape == (BATCH, N_POINTS), out.shape
    max_err = float(jnp.abs(out - ref).max())
    assert max_err < 5e-4, max_err

    print("KERNEL_OK")
</pallas_src>

<mosaic_0001>
module attributes {stable_mosaic.version = 11 : i64} {
  func.func @mlpunet_kernel(%arg0: i32, %arg1: memref<256x128xf32, #tpu.memory_space<vmem>>, %arg2: memref<128x128xf32, #tpu.memory_space<vmem>>, %arg3: memref<1x128xf32, #tpu.memory_space<vmem>>, %arg4: memref<256x128xf32, #tpu.memory_space<vmem>>) attributes {dimension_semantics = [#tpu.dimension_semantics<parallel>], iteration_bounds = array<i64: 1>, scalar_prefetch = 0 : i64, scratch_operands = 0 : i64, tpu.core_type = #tpu.core_type<tc>, window_params = [{transform_indices = @transform_0, window_bounds = array<i64: 256, 128>}, {pipeline_mode = #tpu.pipeline_mode<synchronous>, transform_indices = @transform_1, window_bounds = array<i64: 128, 128>}, {pipeline_mode = #tpu.pipeline_mode<synchronous>, transform_indices = @transform_2, window_bounds = array<i64: 1, 128>}, {transform_indices = @transform_3, window_bounds = array<i64: 256, 128>}]} {
    %c0 = arith.constant 0 : index
    %c0_0 = arith.constant 0 : index
    %0 = vector.load %arg1[%c0, %c0_0] : memref<256x128xf32, #tpu.memory_space<vmem>>, vector<256x128xf32>
    %c0_1 = arith.constant 0 : index
    %c0_2 = arith.constant 0 : index
    %1 = vector.load %arg2[%c0_1, %c0_2] : memref<128x128xf32, #tpu.memory_space<vmem>>, vector<128x128xf32>
    %cst = arith.constant dense<0.000000e+00> : vector<256x128xf32>
    %2 = tpu.matmul %0, %1, %cst {dimension_numbers = #tpu.dot_dimension_numbers<[1], [0], [0], [1], [0, 0, 1, 1], [], []>} : vector<256x128xf32>, vector<128x128xf32>, vector<256x128xf32> -> vector<256x128xf32>
    %c0_3 = arith.constant 0 : index
    %c0_4 = arith.constant 0 : index
    %3 = vector.load %arg3[%c0_3, %c0_4] : memref<1x128xf32, #tpu.memory_space<vmem>>, vector<1x128xf32>
    %4 = vector.broadcast %3 : vector<1x128xf32> to vector<256x128xf32>
    %5 = arith.addf %2, %4 : vector<256x128xf32>
    %c0_5 = arith.constant 0 : index
    %c0_6 = arith.constant 0 : index
    %6 = vector.load %arg4[%c0_5, %c0_6] : memref<256x128xf32, #tpu.memory_space<vmem>>, vector<256x128xf32>
    tpu.vector_store %arg4[%c0_5, %c0_6], %5 {strides = array<i32>} : memref<256x128xf32, #tpu.memory_space<vmem>>, vector<256x128xf32>,
    return
  }
  func.func @transform_0(%arg0: i32) -> (i32, i32) {
    %c0_i32 = arith.constant 0 : i32
    %c0_i32_0 = arith.constant 0 : i32
    return %arg0, %c0_i32 : i32, i32
  }
  func.func @transform_1(%arg0: i32) -> (i32, i32) {
    %c0_i32 = arith.constant 0 : i32
    %c0_i32_0 = arith.constant 0 : i32
    %c0_i32_1 = arith.constant 0 : i32
    return %c0_i32, %c0_i32_0 : i32, i32
  }
  func.func @transform_2(%arg0: i32) -> (i32, i32) {
    %c0_i32 = arith.constant 0 : i32
    %c0_i32_0 = arith.constant 0 : i32
    %c0_i32_1 = arith.constant 0 : i32
    return %c0_i32, %c0_i32_0 : i32, i32
  }
  func.func @transform_3(%arg0: i32) -> (i32, i32) {
    %c0_i32 = arith.constant 0 : i32
    %c0_i32_0 = arith.constant 0 : i32
    return %arg0, %c0_i32 : i32, i32
  }
}

</mosaic_0001>

<llo_original>
// kernel: mlpunet_forward.1
$region0: #{mlpunet_forward.1}
  #allocation0 [shape = 'u32[]', space=smem, size = 0x4, offset = 0x4, fixed_abs, tag = 'smem constant byte address 0x4 - core index']
  #allocation1 [shape = 'u32[144,128]{1,0:T(1,128)}', space=vmem, size = 0x12000, scoped, tag = 'internal scratch']
  %s0 = inlined_call_operand.hbm [shape: f32[256,128], index: 0, kind: input, shape index: {}]
  %s1 = inlined_call_operand.hbm [shape: f32[128,128], index: 1, kind: input, shape index: {}]
  %s2 = inlined_call_operand.vmem [shape: f32[1,128], index: 2, kind: input, shape index: {}]
  %s3 = inlined_call_operand.hbm [shape: f32[256,128], index: 3, kind: output, shape index: {}]
  %s4 = sld [smem:[#allocation0]]
  $region30: #{mlpunet_forward.1} parent=0
    _
  %s6 = ssub.s32 1, %s4
  %s7 = scalar_select 0, %s6, %s4
  $region1: #{mlpunet_forward.1} parent=0
    #allocation2 [shape = 'u8[131072]{0}', space=vmem, size = 0x20000, scoped, tag = 'input window, operand 0, single buffered']
    #allocation3 [shape = 's32[1]{0}', space=sflag, size = 0x4, scoped, tag = 'scoped memory for mlpunet_forward.1']
    #allocation4 [shape = 's32[1]{0}', space=sflag, size = 0x4, scoped, tag = 'scoped memory for mlpunet_forward.1']
    #allocation5 [shape = 'u8[65536]{0}', space=vmem, size = 0x10000, scoped, tag = 'input window, operand 1, single buffered']
    #allocation6 [shape = 's32[1]{0}', space=sflag, size = 0x4, scoped, tag = 'scoped memory for mlpunet_forward.1']
    #allocation7 [shape = 'u8[131072]{0}', space=vmem, size = 0x20000, scoped, tag = 'output window, operand 0, single buffered']
    %8 = vsyncpa [#allocation3], 0
    %9 = vsyncpa [#allocation6], 0
    %10 = vsyncpa [#allocation4], 0
    // Predicated region
    $region2: #{mlpunet_forward.1} parent=1 // pred_check
      _
    $region3: #{mlpunet_forward.1} parent=1 // pred_check_branch
      %12 = sbr.rel (0) target = $region5
    $region4: #{mlpunet_forward.1} parent=1 // pred_region
      %s14 = ssub.s32 4096, 4096
      %15 = vsyncadd [#allocation3], %s14
      %s16 = sshll.u32 [#allocation2], 4
      %s17 = int_to_ptr.vmem [resolvable:$true] %s16
      %22 = dma.hbm_to_vmem [thread:$0]  %s0, 4096, %s17, [#allocation3], 128, 128, 8
    $region5: #{mlpunet_forward.1} parent=1 // pred_fallthru
      _
    // Predicated region
    $region6: #{mlpunet_forward.1} parent=1 // pred_check
      _
    $region7: #{mlpunet_forward.1} parent=1 // pred_check_branch
      %24 = sbr.rel (0) target = $region9
    $region8: #{mlpunet_forward.1} parent=1 // pred_region
      %s26 = ssub.s32 2048, 2048
      %27 = vsyncadd [#allocation6], %s26
      %s28 = sshll.u32 [#allocation5], 4
      %s29 = int_to_ptr.vmem [resolvable:$true] %s28
      %34 = dma.hbm_to_vmem [thread:$0]  %s1, 2048, %s29, [#allocation6], 128, 128, 8
    $region9: #{mlpunet_forward.1} parent=1 // pred_fallthru
      _
    // Predicated region
    $region10: #{mlpunet_forward.1} parent=1 // pred_check
      _
    $region11: #{mlpunet_forward.1} parent=1 // pred_check_branch
      %36 = sbr.rel (0) target = $region13
    $region12: #{mlpunet_forward.1} parent=1 // pred_region
      _
    $region13: #{mlpunet_forward.1} parent=1 // pred_fallthru
      _
    // Predicated region
    $region14: #{mlpunet_forward.1} parent=1 // pred_check
      _
    $region15: #{mlpunet_forward.1} parent=1 // pred_check_branch
      %38 = sbr.rel (0) target = $region17
    $region16: #{mlpunet_forward.1} parent=1 // pred_region
      %39 = dma.done [#allocation3], 4096
    $region17: #{mlpunet_forward.1} parent=1 // pred_fallthru
      _
    // Predicated region
    $region18: #{mlpunet_forward.1} parent=1 // pred_check
      _
    $region19: #{mlpunet_forward.1} parent=1 // pred_check_branch
      %41 = sbr.rel (0) target = $region21
    $region20: #{mlpunet_forward.1} parent=1 // pred_region
      %42 = dma.done [#allocation6], 2048
    $region21: #{mlpunet_forward.1} parent=1 // pred_fallthru
      _
    %v43 = vld [vmem:[#allocation2] sm:$0xff]
    %v44 = vld [vmem:[#allocation2 + $0x8] sm:$0xff]
    %v45 = vld [vmem:[#allocation2 + $0x10] sm:$0xff]
    %v46 = vld [vmem:[#allocation2 + $0x18] sm:$0xff]
    %v47 = vld [vmem:[#allocation2 + $0x20] sm:$0xff]
    %v48 = vld [vmem:[#allocation2 + $0x28] sm:$0xff]
    %v49 = vld [vmem:[#allocation2 + $0x30] sm:$0xff]
    %v50 = vld [vmem:[#allocation2 + $0x38] sm:$0xff]
    %v51 = vld [vmem:[#allocation2 + $0x40] sm:$0xff]
    %v52 = vld [vmem:[#allocation2 + $0x48] sm:$0xff]
    %v53 = vld [vmem:[#allocation2 + $0x50] sm:$0xff]
    %v54 = vld [vmem:[#allocation2 + $0x58] sm:$0xff]
    %v55 = vld [vmem:[#allocation2 + $0x60] sm:$0xff]
    %v56 = vld [vmem:[#allocation2 + $0x68] sm:$0xff]
    %v57 = vld [vmem:[#allocation2 + $0x70] sm:$0xff]
    %v58 = vld [vmem:[#allocation2 + $0x78] sm:$0xff]
    %v59 = vld [vmem:[#allocation2 + $0x80] sm:$0xff]
    %v60 = vld [vmem:[#allocation2 + $0x88] sm:$0xff]
    %v61 = vld [vmem:[#allocation2 + $0x90] sm:$0xff]
    %v62 = vld [vmem:[#allocation2 + $0x98] sm:$0xff]
    %v63 = vld [vmem:[#allocation2 + $0xa0] sm:$0xff]
    %v64 = vld [vmem:[#allocation2 + $0xa8] sm:$0xff]
    %v65 = vld [vmem:[#allocation2 + $0xb0] sm:$0xff]
    %v66 = vld [vmem:[#allocation2 + $0xb8] sm:$0xff]
    %v67 = vld [vmem:[#allocation2 + $0xc0] sm:$0xff]
    %v68 = vld [vmem:[#allocation2 + $0xc8] sm:$0xff]
    %v69 = vld [vmem:[#allocation2 + $0xd0] sm:$0xff]
    %v70 = vld [vmem:[#allocation2 + $0xd8] sm:$0xff]
    %v71 = vld [vmem:[#allocation2 + $0xe0] sm:$0xff]
    %v72 = vld [vmem:[#allocation2 + $0xe8] sm:$0xff]
    %v73 = vld [vmem:[#allocation2 + $0xf0] sm:$0xff]
    %v74 = vld [vmem:[#allocation2 + $0xf8] sm:$0xff]
    %v75 = vld [vmem:[#allocation5] sm:$0xff]
    %v76 = vld [vmem:[#allocation5 + $0x8] sm:$0xff]
    %v77 = vld [vmem:[#allocation5 + $0x10] sm:$0xff]
    %v78 = vld [vmem:[#allocation5 + $0x18] sm:$0xff]
    %v79 = vld [vmem:[#allocation5 + $0x20] sm:$0xff]
    %v80 = vld [vmem:[#allocation5 + $0x28] sm:$0xff]
    %v81 = vld [vmem:[#allocation5 + $0x30] sm:$0xff]
    %v82 = vld [vmem:[#allocation5 + $0x38] sm:$0xff]
    %v83 = vld [vmem:[#allocation5 + $0x40] sm:$0xff]
    %v84 = vld [vmem:[#allocation5 + $0x48] sm:$0xff]
    %v85 = vld [vmem:[#allocation5 + $0x50] sm:$0xff]
    %v86 = vld [vmem:[#allocation5 + $0x58] sm:$0xff]
    %v87 = vld [vmem:[#allocation5 + $0x60] sm:$0xff]
    %v88 = vld [vmem:[#allocation5 + $0x68] sm:$0xff]
    %v89 = vld [vmem:[#allocation5 + $0x70] sm:$0xff]
    %v90 = vld [vmem:[#allocation5 + $0x78] sm:$0xff]
    %v91 = vld [vmem:[%s2] sm:$0x1]
    %v93 = vlaneseq
    %v94 = vshrl.u32 %v93, 7
    %v95 = vsub.s32 0, %v94
    %v96 = vrot.slane %v91, %v95
    %98 = vmatprep.subr.mxu0 0.0
    %99 = vmatpush1.msra.mxu0 %v75
    %100 = vmatprep.subr.mxu0 0.0
    %101 = vmatpush1.msra.mxu0 %v76
    %102 = vmatprep.subr.mxu0 0.0
    %103 = vmatpush1.msra.mxu0 %v77
    %104 = vmatprep.subr.mxu0 0.0
    %105 = vmatpush1.msra.mxu0 %v78
    %106 = vmatprep.subr.mxu0 0.0
    %107 = vmatpush1.msra.mxu0 %v79
    %108 = vmatprep.subr.mxu0 0.0
    %109 = vmatpush1.msra.mxu0 %v80
    %110 = vmatprep.subr.mxu0 0.0
    %111 = vmatpush1.msra.mxu0 %v81
    %112 = vmatprep.subr.mxu0 0.0
    %113 = vmatpush1.msra.mxu0 %v82
    %114 = vmatprep.subr.mxu0 0.0
    %115 = vmatpush1.msra.mxu0 %v83
    %116 = vmatprep.subr.mxu0 0.0
    %117 = vmatpush1.msra.mxu0 %v84
    %118 = vmatprep.subr.mxu0 0.0
    %119 = vmatpush1.msra.mxu0 %v85
    %120 = vmatprep.subr.mxu0 0.0
    %121 = vmatpush1.msra.mxu0 %v86
    %122 = vmatprep.subr.mxu0 0.0
    %123 = vmatpush1.msra.mxu0 %v87
    %124 = vmatprep.subr.mxu0 0.0
    %125 = vmatpush1.msra.mxu0 %v88
    %126 = vmatprep.subr.mxu0 0.0
    %127 = vmatpush1.msra.mxu0 %v89
    %128 = vmatprep.subr.mxu0 0.0
    %129 = vmatpush1.msra.mxu0 %v90
    %130 = vmatprep.subr.mxu0 0.0
    %131 = vmatpush1.msra.mxu0 0.0
    %132 = vmatprep.subr.mxu0 0.0
    %133 = vmatpush1.msra.mxu0 0.0
    %134 = vmatprep.subr.mxu0 0.0
    %135 = vmatpush1.msra.mxu0 0.0
    %136 = vmatprep.subr.mxu0 0.0
    %137 = vmatpush1.msra.mxu0 0.0
    %138 = vmatprep.subr.mxu0 0.0
    %139 = vmatpush1.msra.mxu0 0.0
    %140 = vmatprep.subr.mxu0 0.0
    %141 = vmatpush1.msra.mxu0 0.0
    %142 = vmatprep.subr.mxu0 0.0
    %143 = vmatpush1.msra.mxu0 0.0
    %144 = vmatprep.subr.mxu0 0.0
    %145 = vmatpush1.msra.mxu0 0.0
    %146 = vmatprep.subr.mxu0 0.0
    %147 = vmatpush1.msra.mxu0 0.0
    %148 = vmatprep.subr.mxu0 0.0
    %149 = vmatpush1.msra.mxu0 0.0
    %150 = vmatprep.subr.mxu0 0.0
    %151 = vmatpush1.msra.mxu0 0.0
    %152 = vmatprep.subr.mxu0 0.0
    %153 = vmatpush1.msra.mxu0 0.0
    %154 = vmatprep.subr.mxu0 0.0
    %155 = vmatpush1.msra.mxu0 0.0
    %156 = vmatprep.subr.mxu0 0.0
    %157 = vmatpush1.msra.mxu0 0.0
    %158 = vmatprep.subr.mxu0 0.0
    %159 = vmatpush1.msra.mxu0 0.0
    %160 = vmatprep.subr.mxu0 0.0
    %161 = vmatpush1.msra.mxu0 0.0
    %162 = vmatprep.mubr.f32.mxu0 0.0
    %163 = vmatmul.mubr.f32.gmra.mrb[0].mxu0 %v43
    %v164 = vpop.f32.mrb[0].mxu0
    %v165 = vadd.f32 %v96, %v164
    %v166 = vpop.f32.mrb[0].mxu0
    %167 = vmatprep.mubr.f32.mxu0 0.0
    %168 = vmatmul.mubr.f32.gmra.mrb[0].mxu0 %v44
    %v169 = vpop.f32.mrb[0].mxu0
    %v170 = vadd.f32 %v96, %v169
    %v171 = vpop.f32.mrb[0].mxu0
    %172 = vmatprep.mubr.f32.mxu0 0.0
    %173 = vmatmul.mubr.f32.gmra.mrb[0].mxu0 %v45
    %v174 = vpop.f32.mrb[0].mxu0
    %v175 = vadd.f32 %v96, %v174
    %v176 = vpop.f32.mrb[0].mxu0
    %177 = vmatprep.mubr.f32.mxu0 0.0
    %178 = vmatmul.mubr.f32.gmra.mrb[0].mxu0 %v46
    %v179 = vpop.f32.mrb[0].mxu0
    %v180 = vadd.f32 %v96, %v179
    %v181 = vpop.f32.mrb[0].mxu0
    %182 = vmatprep.mubr.f32.mxu0 0.0
    %183 = vmatmul.mubr.f32.gmra.mrb[0].mxu0 %v47
    %v184 = vpop.f32.mrb[0].mxu0
    %v185 = vadd.f32 %v96, %v184
    %v186 = vpop.f32.mrb[0].mxu0
    %187 = vmatprep.mubr.f32.mxu0 0.0
    %188 = vmatmul.mubr.f32.gmra.mrb[0].mxu0 %v48
    %v189 = vpop.f32.mrb[0].mxu0
    %v190 = vadd.f32 %v96, %v189
    %v191 = vpop.f32.mrb[0].mxu0
    %192 = vmatprep.mubr.f32.mxu0 0.0
    %193 = vmatmul.mubr.f32.gmra.mrb[0].mxu0 %v49
    %v194 = vpop.f32.mrb[0].mxu0
    %v195 = vadd.f32 %v96, %v194
    %v196 = vpop.f32.mrb[0].mxu0
    %197 = vmatprep.mubr.f32.mxu0 0.0
    %198 = vmatmul.mubr.f32.gmra.mrb[0].mxu0 %v50
    %v199 = vpop.f32.mrb[0].mxu0
    %v200 = vadd.f32 %v96, %v199
    %v201 = vpop.f32.mrb[0].mxu0
    %202 = vmatprep.mubr.f32.mxu0 0.0
    %203 = vmatmul.mubr.f32.gmra.mrb[0].mxu0 %v51
    %v204 = vpop.f32.mrb[0].mxu0
    %v205 = vadd.f32 %v96, %v204
    %v206 = vpop.f32.mrb[0].mxu0
    %207 = vmatprep.mubr.f32.mxu0 0.0
    %208 = vmatmul.mubr.f32.gmra.mrb[0].mxu0 %v52
    %v209 = vpop.f32.mrb[0].mxu0
    %v210 = vadd.f32 %v96, %v209
    %v211 = vpop.f32.mrb[0].mxu0
    %212 = vmatprep.mubr.f32.mxu0 0.0
    %213 = vmatmul.mubr.f32.gmra.mrb[0].mxu0 %v53
    %v214 = vpop.f32.mrb[0].mxu0
    %v215 = vadd.f32 %v96, %v214
    %v216 = vpop.f32.mrb[0].mxu0
    %217 = vmatprep.mubr.f32.mxu0 0.0
    %218 = vmatmul.mubr.f32.gmra.mrb[0].mxu0 %v54
    %v219 = vpop.f32.mrb[0].mxu0
    %v220 = vadd.f32 %v96, %v219
    %v221 = vpop.f32.mrb[0].mxu0
    %222 = vmatprep.mubr.f32.mxu0 0.0
    %223 = vmatmul.mubr.f32.gmra.mrb[0].mxu0 %v55
    %v224 = vpop.f32.mrb[0].mxu0
    %v225 = vadd.f32 %v96, %v224
    %v226 = vpop.f32.mrb[0].mxu0
    %227 = vmatprep.mubr.f32.mxu0 0.0
    %228 = vmatmul.mubr.f32.gmra.mrb[0].mxu0 %v56
    %v229 = vpop.f32.mrb[0].mxu0
    %v230 = vadd.f32 %v96, %v229
    %v231 = vpop.f32.mrb[0].mxu0
    %232 = vmatprep.mubr.f32.mxu0 0.0
    %233 = vmatmul.mubr.f32.gmra.mrb[0].mxu0 %v57
    %v234 = vpop.f32.mrb[0].mxu0
    %v235 = vadd.f32 %v96, %v234
    %v236 = vpop.f32.mrb[0].mxu0
    %237 = vmatprep.mubr.f32.mxu0 0.0
    %238 = vmatmul.mubr.f32.gmra.mrb[0].mxu0 %v58
    %v239 = vpop.f32.mrb[0].mxu0
    %v240 = vadd.f32 %v96, %v239
    %v241 = vpop.f32.mrb[0].mxu0
    %242 = vmatprep.mubr.f32.mxu0 0.0
    %243 = vmatmul.mubr.f32.gmra.mrb[0].mxu0 %v59
    %v244 = vpop.f32.mrb[0].mxu0
    %v245 = vadd.f32 %v96, %v244
    %v246 = vpop.f32.mrb[0].mxu0
    %247 = vmatprep.mubr.f32.mxu0 0.0
    %248 = vmatmul.mubr.f32.gmra.mrb[0].mxu0 %v60
    %v249 = vpop.f32.mrb[0].mxu0
    %v250 = vadd.f32 %v96, %v249
    %v251 = vpop.f32.mrb[0].mxu0
    %252 = vmatprep.mubr.f32.mxu0 0.0
    %253 = vmatmul.mubr.f32.gmra.mrb[0].mxu0 %v61
    %v254 = vpop.f32.mrb[0].mxu0
    %v255 = vadd.f32 %v96, %v254
    %v256 = vpop.f32.mrb[0].mxu0
    %257 = vmatprep.mubr.f32.mxu0 0.0
    %258 = vmatmul.mubr.f32.gmra.mrb[0].mxu0 %v62
    %v259 = vpop.f32.mrb[0].mxu0
    %v260 = vadd.f32 %v96, %v259
    %v261 = vpop.f32.mrb[0].mxu0
    %262 = vmatprep.mubr.f32.mxu0 0.0
    %263 = vmatmul.mubr.f32.gmra.mrb[0].mxu0 %v63
    %v264 = vpop.f32.mrb[0].mxu0
    %v265 = vadd.f32 %v96, %v264
    %v266 = vpop.f32.mrb[0].mxu0
    %267 = vmatprep.mubr.f32.mxu0 0.0
    %268 = vmatmul.mubr.f32.gmra.mrb[0].mxu0 %v64
    %v269 = vpop.f32.mrb[0].mxu0
    %v270 = vadd.f32 %v96, %v269
    %v271 = vpop.f32.mrb[0].mxu0
    %272 = vmatprep.mubr.f32.mxu0 0.0
    %273 = vmatmul.mubr.f32.gmra.mrb[0].mxu0 %v65
    %v274 = vpop.f32.mrb[0].mxu0
    %v275 = vadd.f32 %v96, %v274
    %v276 = vpop.f32.mrb[0].mxu0
    %277 = vmatprep.mubr.f32.mxu0 0.0
    %278 = vmatmul.mubr.f32.gmra.mrb[0].mxu0 %v66
    %v279 = vpop.f32.mrb[0].mxu0
    %v280 = vadd.f32 %v96, %v279
    %v281 = vpop.f32.mrb[0].mxu0
    %282 = vmatprep.mubr.f32.mxu0 0.0
    %283 = vmatmul.mubr.f32.gmra.mrb[0].mxu0 %v67
    %v284 = vpop.f32.mrb[0].mxu0
    %v285 = vadd.f32 %v96, %v284
    %v286 = vpop.f32.mrb[0].mxu0
    %287 = vmatprep.mubr.f32.mxu0 0.0
    %288 = vmatmul.mubr.f32.gmra.mrb[0].mxu0 %v68
    %v289 = vpop.f32.mrb[0].mxu0
    %v290 = vadd.f32 %v96, %v289
    %v291 = vpop.f32.mrb[0].mxu0
    %292 = vmatprep.mubr.f32.mxu0 0.0
    %293 = vmatmul.mubr.f32.gmra.mrb[0].mxu0 %v69
    %v294 = vpop.f32.mrb[0].mxu0
    %v295 = vadd.f32 %v96, %v294
    %v296 = vpop.f32.mrb[0].mxu0
    %297 = vmatprep.mubr.f32.mxu0 0.0
    %298 = vmatmul.mubr.f32.gmra.mrb[0].mxu0 %v70
    %v299 = vpop.f32.mrb[0].mxu0
    %v300 = vadd.f32 %v96, %v299
    %v301 = vpop.f32.mrb[0].mxu0
    %302 = vmatprep.mubr.f32.mxu0 0.0
    %303 = vmatmul.mubr.f32.gmra.mrb[0].mxu0 %v71
    %v304 = vpop.f32.mrb[0].mxu0
    %v305 = vadd.f32 %v96, %v304
    %v306 = vpop.f32.mrb[0].mxu0
    %307 = vmatprep.mubr.f32.mxu0 0.0
    %308 = vmatmul.mubr.f32.gmra.mrb[0].mxu0 %v72
    %v309 = vpop.f32.mrb[0].mxu0
    %v310 = vadd.f32 %v96, %v309
    %v311 = vpop.f32.mrb[0].mxu0
    %312 = vmatprep.mubr.f32.mxu0 0.0
    %313 = vmatmul.mubr.f32.gmra.mrb[0].mxu0 %v73
    %v314 = vpop.f32.mrb[0].mxu0
    %v315 = vadd.f32 %v96, %v314
    %v316 = vpop.f32.mrb[0].mxu0
    %317 = vmatprep.mubr.f32.mxu0 0.0
    %318 = vmatmul.mubr.f32.gmra.mrb[0].mxu0 %v74
    %v319 = vpop.f32.mrb[0].mxu0
    %v320 = vadd.f32 %v96, %v319
    %v321 = vpop.f32.mrb[0].mxu0
    %322 = vdwg.mxu0
    %323 = vst [vmem:[#allocation7] sm:$0xff] %v165
    %324 = vst [vmem:[#allocation7 + $0x8] sm:$0xff] %v170
    %325 = vst [vmem:[#allocation7 + $0x10] sm:$0xff] %v175
    %326 = vst [vmem:[#allocation7 + $0x18] sm:$0xff] %v180
    %327 = vst [vmem:[#allocation7 + $0x20] sm:$0xff] %v185
    %328 = vst [vmem:[#allocation7 + $0x28] sm:$0xff] %v190
    %329 = vst [vmem:[#allocation7 + $0x30] sm:$0xff] %v195
    %330 = vst [vmem:[#allocation7 + $0x38] sm:$0xff] %v200
    %331 = vst [vmem:[#allocation7 + $0x40] sm:$0xff] %v205
    %332 = vst [vmem:[#allocation7 + $0x48] sm:$0xff] %v210
    %333 = vst [vmem:[#allocation7 + $0x50] sm:$0xff] %v215
    %334 = vst [vmem:[#allocation7 + $0x58] sm:$0xff] %v220
    %335 = vst [vmem:[#allocation7 + $0x60] sm:$0xff] %v225
    %336 = vst [vmem:[#allocation7 + $0x68] sm:$0xff] %v230
    %337 = vst [vmem:[#allocation7 + $0x70] sm:$0xff] %v235
    %338 = vst [vmem:[#allocation7 + $0x78] sm:$0xff] %v240
    %339 = vst [vmem:[#allocation7 + $0x80] sm:$0xff] %v245
    %340 = vst [vmem:[#allocation7 + $0x88] sm:$0xff] %v250
    %341 = vst [vmem:[#allocation7 + $0x90] sm:$0xff] %v255
    %342 = vst [vmem:[#allocation7 + $0x98] sm:$0xff] %v260
    %343 = vst [vmem:[#allocation7 + $0xa0] sm:$0xff] %v265
    %344 = vst [vmem:[#allocation7 + $0xa8] sm:$0xff] %v270
    %345 = vst [vmem:[#allocation7 + $0xb0] sm:$0xff] %v275
    %346 = vst [vmem:[#allocation7 + $0xb8] sm:$0xff] %v280
    %347 = vst [vmem:[#allocation7 + $0xc0] sm:$0xff] %v285
    %348 = vst [vmem:[#allocation7 + $0xc8] sm:$0xff] %v290
    %349 = vst [vmem:[#allocation7 + $0xd0] sm:$0xff] %v295
    %350 = vst [vmem:[#allocation7 + $0xd8] sm:$0xff] %v300
    %351 = vst [vmem:[#allocation7 + $0xe0] sm:$0xff] %v305
    %352 = vst [vmem:[#allocation7 + $0xe8] sm:$0xff] %v310
    %353 = vst [vmem:[#allocation7 + $0xf0] sm:$0xff] %v315
    %354 = vst [vmem:[#allocation7 + $0xf8] sm:$0xff] %v320
    // Predicated region
    $region22: #{mlpunet_forward.1} parent=1 // pred_check
      _
    $region23: #{mlpunet_forward.1} parent=1 // pred_check_branch
      %356 = sbr.rel (0) target = $region25
    $region24: #{mlpunet_forward.1} parent=1 // pred_region
      %s358 = ssub.s32 4096, 4096
      %359 = vsyncadd [#allocation4], %s358
      %s360 = sshll.u32 [#allocation7], 4
      %s361 = int_to_ptr.vmem [resolvable:$true] %s360
      %366 = dma.vmem_to_hbm [thread:$0]  %s361, 4096, %s3, [#allocation4], 128, 128, 8
    $region25: #{mlpunet_forward.1} parent=1 // pred_fallthru
      _
    // Predicated region
    $region26: #{mlpunet_forward.1} parent=1 // pred_check
      _
    $region27: #{mlpunet_forward.1} parent=1 // pred_check_branch
      %368 = sbr.rel (0) target = $region29
    $region28: #{mlpunet_forward.1} parent=1 // pred_region
      %369 = dma.done [#allocation4], 4096
    $region29: #{mlpunet_forward.1} parent=1 // pred_fallthru
      _
    %370 = vsyncpa [#allocation3], 1
    %371 = vsyncpa [#allocation6], 1
    %372 = vsyncpa [#allocation4], 1

</llo_original>
